<compile_context>
chip_gen: v7x
topology: tpu7x:2x2x1
jax: 0.10.0
libtpu: 0.0.40
codegen_flags: <defaults>
</compile_context>

<pallas_src>
import functools

import jax
import jax.numpy as jnp
from jax.experimental import pallas as pl
from jax.experimental.pallas import tpu as pltpu


# ----------------------------------------------------------------------------
# Small trace-time helpers
# ----------------------------------------------------------------------------
def _round_up(x, m):
    return (x + m - 1) // m * m


# ----------------------------------------------------------------------------
# Kernel 1: tiled matmul + bias (+ReLU)   (im2col stem / stride-2 / 1x1 path)
# ----------------------------------------------------------------------------
def _matmul_bias_kernel(a_ref, b_ref, c_ref, o_ref, acc_ref, *, relu):
    k = pl.program_id(2)

    @pl.when(k == 0)
    def _():
        acc_ref[...] = jnp.zeros_like(acc_ref)

    acc_ref[...] += jnp.dot(a_ref[...], b_ref[...],
                            preferred_element_type=jnp.float32)

    @pl.when(k == pl.num_programs(2) - 1)
    def _():
        y = acc_ref[...] + c_ref[...]
        if relu:
            y = jnp.maximum(y, 0.0)
        o_ref[...] = y.astype(o_ref.dtype)


def matmul_bias(a, b, bias, relu=False, out_dtype=jnp.bfloat16):
    """(M,K)@(K,N) + bias (+ReLU).  a/b bf16, bias f32, f32 MXU accumulation."""
    M, K = a.shape
    Kb, N = b.shape
    assert K == Kb

    # Pick tiles first, then pad dims up to tile multiples (always divisible).
    tm = min(256, _round_up(M, 8))
    M_pad = _round_up(M, tm)
    if N < 128:
        tn, N_pad = N, N                       # full-dim lane block (no pad)
    else:
        tn = min(256, _round_up(N, 128))
        N_pad = _round_up(N, tn)
    if K <= 1024:
        tk, K_pad = K, K                       # single K step, no padding
    else:
        K_pad = _round_up(K, 128)
        tk, t = 128, 128
        while t <= 1024:
            if K_pad % t == 0:
                tk = t
            t += 128

    a_p = a if (M_pad == M and K_pad == K) else jnp.pad(
        a, ((0, M_pad - M), (0, K_pad - K)))
    b_p = b if (K_pad == K and N_pad == N) else jnp.pad(
        b, ((0, K_pad - K), (0, N_pad - N)))
    c_p = bias.reshape(1, N).astype(jnp.float32)
    if N_pad != N:
        c_p = jnp.pad(c_p, ((0, 0), (0, N_pad - N)))

    out = pl.pallas_call(
        functools.partial(_matmul_bias_kernel, relu=relu),
        out_shape=jax.ShapeDtypeStruct((M_pad, N_pad), out_dtype),
        grid=(M_pad // tm, N_pad // tn, K_pad // tk),
        in_specs=[
            pl.BlockSpec((tm, tk), lambda i, j, k: (i, k)),
            pl.BlockSpec((tk, tn), lambda i, j, k: (k, j)),
            pl.BlockSpec((1, tn), lambda i, j, k: (0, j)),
        ],
        out_specs=pl.BlockSpec((tm, tn), lambda i, j, k: (i, j)),
        scratch_shapes=[pltpu.VMEM((tm, tn), jnp.float32)],
        compiler_params=pltpu.CompilerParams(
            dimension_semantics=("parallel", "parallel", "arbitrary")),
    )(a_p, b_p, c_p)
    if M_pad != M or N_pad != N:
        out = out[:M, :N]
    return out


# ----------------------------------------------------------------------------
# Kernel 2: implicit-GEMM 3x3 / stride-1 / pad-1 conv on padded-flat activations
# ----------------------------------------------------------------------------
# Padded-flat layout: activation (N, H, W, C) stored as the zero-bordered tensor
# (N, H+2, W+2, C) flattened to (N*(H+2)*(W+2), C) bf16 and row-padded to a
# multiple of the M tile.  Output position m (padded coord (oh, ow)) reads input
# rows m + (di-1)*(W+2) + (dj-1) for the 9 taps, so the kernel only needs the
# current row-block plus a halo from the previous/next blocks.
def _conv3x3_kernel(xp_ref, xc_ref, xn_ref, w_ref, b_ref, m_ref, *rest,
                    tm, halo, wp, relu, has_residual):
    if has_residual:
        r_ref, o_ref, ext_ref, acc_ref = rest
    else:
        r_ref = None
        o_ref, ext_ref, acc_ref = rest

    # Assemble the haloed row window covering rows [i*tm - halo, i*tm + tm + halo).
    ext_ref[0:halo, :] = xp_ref[tm - halo:tm, :]
    ext_ref[halo:halo + tm, :] = xc_ref[...]
    ext_ref[halo + tm:halo + tm + halo, :] = xn_ref[0:halo, :]

    acc_ref[...] = jnp.zeros_like(acc_ref)
    for di in range(3):
        for dj in range(3):
            off = di * wp + dj              # == halo + (di-1)*wp + (dj-1)
            t = di * 3 + dj
            acc_ref[...] += jnp.dot(ext_ref[off:off + tm, :], w_ref[t],
                                    preferred_element_type=jnp.float32)

    y = (acc_ref[...] + b_ref[...]) * m_ref[...]      # zero borders / tail
    if has_residual:
        y = y + r_ref[...].astype(jnp.float32)
    if relu:
        y = jnp.maximum(y, 0.0)
    o_ref[...] = y.astype(o_ref.dtype)


def _tm_for(m_total, wp):
    tm = min(256, _round_up(m_total, 8))
    return max(tm, _round_up(wp + 2, 8))     # need tm >= halo (= wp+1)


def _row_mask(n, h, w, rows):
    hp, wp = h + 2, w + 2
    r = jnp.arange(rows, dtype=jnp.int32)
    q = r % (hp * wp)
    oh = q // wp
    ow = q % wp
    valid = (r < n * hp * wp) & (oh >= 1) & (oh <= h) & (ow >= 1) & (ow <= w)
    return valid.astype(jnp.float32)[:, None]


def to_padded_flat(x_nhwc):
    n, h, w, c = x_nhwc.shape
    hp, wp = h + 2, w + 2
    xp = jnp.pad(x_nhwc, ((0, 0), (1, 1), (1, 1), (0, 0)))
    flat = xp.reshape(n * hp * wp, c).astype(jnp.bfloat16)
    rows = _round_up(n * hp * wp, _tm_for(n * hp * wp, wp))
    if rows != flat.shape[0]:
        flat = jnp.pad(flat, ((0, rows - flat.shape[0]), (0, 0)))
    return flat


def from_padded_flat(flat, n, h, w, c):
    hp, wp = h + 2, w + 2
    return flat[:n * hp * wp].reshape(n, hp, wp, c)


def conv3x3_s1(flat, shape_nhwc, w9, bias, residual=None, relu=True):
    """Implicit-GEMM 3x3/s1/p1 conv.  Input/output both in padded-flat layout."""
    n, h, w, c = shape_nhwc
    hp, wp = h + 2, w + 2
    m_total = n * hp * wp
    oc = w9.shape[2]

    tm = _tm_for(m_total, wp)
    nb = _round_up(m_total, tm) // tm
    rows = nb * tm
    if flat.shape[0] < rows:
        flat = jnp.pad(flat, ((0, rows - flat.shape[0]), (0, 0)))
    elif flat.shape[0] > rows:
        flat = flat[:rows]

    halo = wp + 1
    ext_rows = _round_up(tm + 2 * halo, 8)
    tn = oc if oc < 128 else min(256, oc)
    n_oc = oc // tn

    mask = _row_mask(n, h, w, rows)
    bias2 = bias.reshape(1, oc).astype(jnp.float32)

    has_residual = residual is not None
    inputs = [flat, flat, flat, w9, bias2, mask]
    in_specs = [
        pl.BlockSpec((tm, c), lambda j, i: (jnp.maximum(i - 1, 0), 0)),
        pl.BlockSpec((tm, c), lambda j, i: (i, 0)),
        pl.BlockSpec((tm, c), lambda j, i: (jnp.minimum(i + 1, nb - 1), 0)),
        pl.BlockSpec((9, c, tn), lambda j, i: (0, 0, j)),
        pl.BlockSpec((1, tn), lambda j, i: (0, j)),
        pl.BlockSpec((tm, 1), lambda j, i: (i, 0)),
    ]
    if has_residual:
        res = residual
        if res.shape[0] < rows:
            res = jnp.pad(res, ((0, rows - res.shape[0]), (0, 0)))
        elif res.shape[0] > rows:
            res = res[:rows]
        inputs.append(res)
        in_specs.append(pl.BlockSpec((tm, tn), lambda j, i: (i, j)))

    out = pl.pallas_call(
        functools.partial(_conv3x3_kernel, tm=tm, halo=halo, wp=wp,
                          relu=relu, has_residual=has_residual),
        out_shape=jax.ShapeDtypeStruct((rows, oc), jnp.bfloat16),
        grid=(n_oc, nb),
        in_specs=in_specs,
        out_specs=pl.BlockSpec((tm, tn), lambda j, i: (i, j)),
        scratch_shapes=[pltpu.VMEM((ext_rows, c), jnp.bfloat16),
                        pltpu.VMEM((tm, tn), jnp.float32)],
        compiler_params=pltpu.CompilerParams(
            dimension_semantics=("parallel", "parallel")),
    )(*inputs)
    return out


# ----------------------------------------------------------------------------
# Kernel 3: fused global-average-pool + FC (lane-padded output)
# ----------------------------------------------------------------------------
def _avgpool_fc_kernel(x_ref, w_ref, b_ref, o_ref, *, inv_hw):
    feat = jnp.sum(x_ref[...].astype(jnp.float32), axis=1) * inv_hw   # (N, C)
    o_ref[...] = (jnp.dot(feat.astype(jnp.bfloat16), w_ref[...],
                          preferred_element_type=jnp.float32) + b_ref[...])


def avgpool_fc_padded(flat, shape, fc_w, fc_b):
    n, h, w, c = shape
    hp, wp = h + 2, w + 2
    x3 = flat[:n * hp * wp].reshape(n, hp * wp, c)   # borders are exact zeros
    f = fc_w.shape[1]
    n_pad = _round_up(n, 8)
    f_pad = _round_up(f, 128)
    x3 = jnp.pad(x3, ((0, n_pad - n), (0, 0), (0, 0)))
    w_p = jnp.pad(fc_w.astype(jnp.bfloat16), ((0, 0), (0, f_pad - f)))
    b_p = jnp.pad(fc_b.reshape(1, f).astype(jnp.float32), ((0, 0), (0, f_pad - f)))

    out = pl.pallas_call(
        functools.partial(_avgpool_fc_kernel, inv_hw=1.0 / float(h * w)),
        out_shape=jax.ShapeDtypeStruct((n_pad, f_pad), jnp.float32),
        grid=(1,),
        in_specs=[
            pl.BlockSpec((n_pad, hp * wp, c), lambda i: (0, 0, 0)),
            pl.BlockSpec((c, f_pad), lambda i: (0, 0)),
            pl.BlockSpec((1, f_pad), lambda i: (0, 0)),
        ],
        out_specs=pl.BlockSpec((n_pad, f_pad), lambda i: (0, 0)),
    )(x3, w_p, b_p)
    return out[:n, :f]


# ----------------------------------------------------------------------------
# Plain-JAX glue: im2col (stem / stride-2 convs only), maxpool
# ----------------------------------------------------------------------------
def _im2col(x, kh, kw, stride, padding):
    n, h, w, c = x.shape
    oh = (h + 2 * padding - kh) // stride + 1
    ow = (w + 2 * padding - kw) // stride + 1
    xp = x if padding == 0 else jnp.pad(
        x, ((0, 0), (padding, padding), (padding, padding), (0, 0)))
    cols = []
    for i in range(kh):
        for j in range(kw):
            cols.append(jax.lax.slice(
                xp, (0, i, j, 0),
                (n, i + (oh - 1) * stride + 1, j + (ow - 1) * stride + 1, c),
                (1, stride, stride, 1)))
    patches = jnp.concatenate(cols, axis=-1)
    return patches.reshape(n * oh * ow, kh * kw * c), oh, ow


def conv_im2col(x_nhwc, w_flat, bias, kh, kw, stride, padding, relu):
    n = x_nhwc.shape[0]
    patches, oh, ow = _im2col(x_nhwc.astype(jnp.bfloat16), kh, kw, stride, padding)
    y = matmul_bias(patches, w_flat, bias, relu=relu)
    return y.reshape(n, oh, ow, w_flat.shape[1])


def max_pool_3x3_s2_p1(x):
    n, h, w, c = x.shape
    k, s, pad = 3, 2, 1
    oh = (h + 2 * pad - k) // s + 1
    ow = (w + 2 * pad - k) // s + 1
    xp = jnp.pad(x, ((0, 0), (pad, pad), (pad, pad), (0, 0)),
                 constant_values=-jnp.inf)
    out = None
    for i in range(k):
        for j in range(k):
            win = jax.lax.slice(
                xp, (0, i, j, 0),
                (n, i + (oh - 1) * s + 1, j + (ow - 1) * s + 1, c),
                (1, s, s, 1))
            out = win if out is None else jnp.maximum(out, win)
    return out


# ----------------------------------------------------------------------------
# Parameters (deterministic, synthetic; eval-mode BN folded into weights)
# ----------------------------------------------------------------------------
def make_params(key, out_features=3):
    keys = iter(jax.random.split(key, 128))

    def conv_w(kh, kw, ic, oc):
        fan_in = kh * kw * ic
        return jax.random.normal(next(keys), (kh, kw, ic, oc), jnp.float32) * (
            2.0 / fan_in) ** 0.5

    def bn(oc):
        gamma = 0.5 + 0.5 * jax.random.uniform(next(keys), (oc,), jnp.float32)
        beta = 0.1 * jax.random.normal(next(keys), (oc,), jnp.float32)
        mean = jnp.zeros((oc,), jnp.float32)
        var = jnp.ones((oc,), jnp.float32)
        scale = gamma / jnp.sqrt(var + 1e-5)
        return scale, beta - mean * scale

    def fold_flat(w, scale):                 # (kh,kw,ic,oc) -> (kh*kw*ic, oc) bf16
        kh, kw, ic, oc = w.shape
        return (w * scale[None, None, None, :]).reshape(kh * kw * ic, oc).astype(
            jnp.bfloat16)

    def fold_taps(w, scale):                 # (3,3,ic,oc) -> (9, ic, oc) bf16
        kh, kw, ic, oc = w.shape
        return (w * scale[None, None, None, :]).reshape(kh * kw, ic, oc).astype(
            jnp.bfloat16)

    p = {}
    w = conv_w(7, 7, 3, 64)
    s, b = bn(64)
    p["conv1_wflat"], p["bn1_b"] = fold_flat(w, s), b

    layers = []
    in_c = 64
    for out_c, nblocks, first_stride in [(64, 2, 1), (128, 2, 2),
                                         (256, 2, 2), (512, 2, 2)]:
        layer = []
        for bi in range(nblocks):
            stride = first_stride if bi == 0 else 1
            ic = in_c if bi == 0 else out_c
            blk = {"stride": stride}
            w1 = conv_w(3, 3, ic, out_c)
            s1, b1 = bn(out_c)
            w2 = conv_w(3, 3, out_c, out_c)
            s2, b2 = bn(out_c)
            blk["bn1_b"], blk["bn2_b"] = b1, b2
            blk["conv2_w9"] = fold_taps(w2, s2)
            if bi == 0 and (stride != 1 or ic != out_c):
                blk["conv1_wflat"] = fold_flat(w1, s1)
                wd = conv_w(1, 1, ic, out_c)
                sd, bd = bn(out_c)
                blk["down_wflat"], blk["dbn_b"] = fold_flat(wd, sd), bd
            else:
                blk["conv1_w9"] = fold_taps(w1, s1)
            layer.append(blk)
        layers.append(layer)
        in_c = out_c
    p["layers"] = layers

    p["fc_w"] = jax.random.normal(next(keys), (512, out_features), jnp.float32) * (
        1.0 / 512.0) ** 0.5
    p["fc_b"] = 0.01 * jax.random.normal(next(keys), (out_features,), jnp.float32)
    return p


# ----------------------------------------------------------------------------
# Forward pass (mirrors ResNet.forward of the PyTorch module)
# ----------------------------------------------------------------------------
def basic_block(flat, shape, p):
    n, h, w, c = shape
    if "conv1_w9" in p:
        # stride-1 block, identity shortcut: fully implicit-GEMM, residual fused
        oc = p["conv1_w9"].shape[2]
        out1 = conv3x3_s1(flat, shape, p["conv1_w9"], p["bn1_b"], relu=True)
        out = conv3x3_s1(out1, (n, h, w, oc), p["conv2_w9"], p["bn2_b"],
                         residual=flat, relu=True)
        return out, (n, h, w, oc)

    # stride-2 block with 1x1 downsample shortcut
    stride = p["stride"]
    oc = p["conv1_wflat"].shape[1]
    xpad = from_padded_flat(flat, n, h, w, c)          # (n, h+2, w+2, c), zero border
    out1 = conv_im2col(xpad, p["conv1_wflat"], p["bn1_b"], 3, 3, stride, 0,
                       relu=True)                      # padding already applied
    oh, ow = out1.shape[1], out1.shape[2]
    flat1 = to_padded_flat(out1)
    xv = xpad[:, 1:h + 1:stride, 1:w + 1:stride, :]    # strided valid pixels
    ident = matmul_bias(xv.reshape(n * oh * ow, c), p["down_wflat"], p["dbn_b"],
                        relu=False)
    res_flat = to_padded_flat(ident.reshape(n, oh, ow, oc))
    out = conv3x3_s1(flat1, (n, oh, ow, oc), p["conv2_w9"], p["bn2_b"],
                     residual=res_flat, relu=True)
    return out, (n, oh, ow, oc)


def resnet_forward(params, x_nchw):
    x = x_nchw.astype(jnp.float32)
    # "if x.size(1) == 2: x = torch.cat((x, x[:, :1, :, :]), dim=1)"
    if x.shape[1] == 2:
        x = jnp.concatenate([x, x[:, :1, :, :]], axis=1)
    x = jnp.transpose(x, (0, 2, 3, 1)).astype(jnp.bfloat16)   # NCHW -> NHWC, bf16

    # Stem: conv7x7/2 + BN(folded) + ReLU + maxpool3x3/2
    x = conv_im2col(x, params["conv1_wflat"], params["bn1_b"], 7, 7, 2, 3, relu=True)
    x = max_pool_3x3_s2_p1(x)

    # layer1..layer4 (BasicBlocks) on the padded-flat bf16 representation
    flat = to_padded_flat(x)
    shape = tuple(x.shape)
    for layer in params["layers"]:
        for blk in layer:
            flat, shape = basic_block(flat, shape, blk)

    # AdaptiveAvgPool2d((1,1)) + flatten + fc (one fused kernel)
    return avgpool_fc_padded(flat, shape, params["fc_w"], params["fc_b"])


if __name__ == "__main__":
    key = jax.random.PRNGKey(0)
    k_params, k_x = jax.random.split(key)
    params = make_params(k_params, out_features=3)

    # NCHW input like the PyTorch module (3 channels; 2-channel inputs are handled
    # by the concat branch in resnet_forward).
    x = jax.random.normal(k_x, (2, 3, 16, 16), jnp.float32)

    out = resnet_forward(params, x)
    out = jax.block_until_ready(out)
    assert out.shape == (2, 3), out.shape
    assert bool(jnp.all(jnp.isfinite(out)))
    print("KERNEL_OK")
</pallas_src>

<mosaic_0001>
module attributes {stable_mosaic.version = 11 : i64} {
  func.func @_matmul_bias_kernel(%arg0: i32, %arg1: i32, %arg2: i32, %arg3: memref<128x147xbf16, #tpu.memory_space<vmem>>, %arg4: memref<147x64xbf16, #tpu.memory_space<vmem>>, %arg5: memref<1x64xf32, #tpu.memory_space<vmem>>, %arg6: memref<128x64xbf16, #tpu.memory_space<vmem>>, %arg7: memref<128x64xf32, #tpu.memory_space<vmem>>) attributes {dimension_semantics = [#tpu.dimension_semantics<parallel>, #tpu.dimension_semantics<parallel>, #tpu.dimension_semantics<arbitrary>], iteration_bounds = array<i64: 1, 1, 1>, scalar_prefetch = 0 : i64, scratch_operands = 1 : i64, tpu.core_type = #tpu.core_type<tc>, window_params = [{transform_indices = @transform_0, window_bounds = array<i64: 128, 147>}, {transform_indices = @transform_1, window_bounds = array<i64: 147, 64>}, {transform_indices = @transform_2, window_bounds = array<i64: 1, 64>}, {transform_indices = @transform_3, window_bounds = array<i64: 128, 64>}]} {
    %c0_i32 = arith.constant 0 : i32
    %0 = arith.cmpi eq, %arg2, %c0_i32 : i32
    %1 = arith.extui %0 : i1 to i32
    %c0_i32_0 = arith.constant 0 : i32
    %2 = arith.cmpi ne, %1, %c0_i32_0 : i32
    scf.if %2 {
      %cst_10 = arith.constant 0.000000e+00 : f32
      %12 = vector.broadcast %cst_10 : f32 to vector<128x64xf32>
      %c0_11 = arith.constant 0 : index
      %c0_12 = arith.constant 0 : index
      %13 = vector.load %arg7[%c0_11, %c0_12] : memref<128x64xf32, #tpu.memory_space<vmem>>, vector<128x64xf32>
      tpu.vector_store %arg7[%c0_11, %c0_12], %12 {strides = array<i32>} : memref<128x64xf32, #tpu.memory_space<vmem>>, vector<128x64xf32>,
    } else {
    }
    %c0 = arith.constant 0 : index
    %c0_1 = arith.constant 0 : index
    %3 = vector.load %arg7[%c0, %c0_1] : memref<128x64xf32, #tpu.memory_space<vmem>>, vector<128x64xf32>
    %c0_2 = arith.constant 0 : index
    %c0_3 = arith.constant 0 : index
    %4 = vector.load %arg3[%c0_2, %c0_3] : memref<128x147xbf16, #tpu.memory_space<vmem>>, vector<128x147xbf16>
    %c0_4 = arith.constant 0 : index
    %c0_5 = arith.constant 0 : index
    %5 = vector.load %arg4[%c0_4, %c0_5] : memref<147x64xbf16, #tpu.memory_space<vmem>>, vector<147x64xbf16>
    %cst = arith.constant dense<0.000000e+00> : vector<128x64xf32>
    %6 = tpu.matmul %4, %5, %cst {dimension_numbers = #tpu.dot_dimension_numbers<[1], [0], [0], [1], [0, 0, 1, 1], [], []>} : vector<128x147xbf16>, vector<147x64xbf16>, vector<128x64xf32> -> vector<128x64xf32>
    %7 = arith.addf %3, %6 : vector<128x64xf32>
    %c0_6 = arith.constant 0 : index
    %c0_7 = arith.constant 0 : index
    %8 = vector.load %arg7[%c0_6, %c0_7] : memref<128x64xf32, #tpu.memory_space<vmem>>, vector<128x64xf32>
    tpu.vector_store %arg7[%c0_6, %c0_7], %7 {strides = array<i32>} : memref<128x64xf32, #tpu.memory_space<vmem>>, vector<128x64xf32>,
    %c0_i32_8 = arith.constant 0 : i32
    %9 = arith.cmpi eq, %arg2, %c0_i32_8 : i32
    %10 = arith.extui %9 : i1 to i32
    %c0_i32_9 = arith.constant 0 : i32
    %11 = arith.cmpi ne, %10, %c0_i32_9 : i32
    scf.if %11 {
      %c0_10 = arith.constant 0 : index
      %c0_11 = arith.constant 0 : index
      %12 = vector.load %arg7[%c0_10, %c0_11] : memref<128x64xf32, #tpu.memory_space<vmem>>, vector<128x64xf32>
      %c0_12 = arith.constant 0 : index
      %c0_13 = arith.constant 0 : index
      %13 = vector.load %arg5[%c0_12, %c0_13] : memref<1x64xf32, #tpu.memory_space<vmem>>, vector<1x64xf32>
      %14 = vector.broadcast %13 : vector<1x64xf32> to vector<128x64xf32>
      %15 = arith.addf %12, %14 : vector<128x64xf32>
      %cst_14 = arith.constant 0.000000e+00 : f32
      %16 = vector.broadcast %cst_14 : f32 to vector<128x64xf32>
      %17 = arith.maximumf %15, %16 : vector<128x64xf32>
      %18 = arith.truncf %17 : vector<128x64xf32> to vector<128x64xbf16>
      %c0_15 = arith.constant 0 : index
      %c0_16 = arith.constant 0 : index
      %19 = vector.load %arg6[%c0_15, %c0_16] : memref<128x64xbf16, #tpu.memory_space<vmem>>, vector<128x64xbf16>
      tpu.vector_store %arg6[%c0_15, %c0_16], %18 {strides = array<i32>} : memref<128x64xbf16, #tpu.memory_space<vmem>>, vector<128x64xbf16>,
    } else {
    }
    return
  }
  func.func @transform_0(%arg0: i32, %arg1: i32, %arg2: i32) -> (i32, i32) {
    %c0_i32 = arith.constant 0 : i32
    return %arg0, %arg2 : i32, i32
  }
  func.func @transform_1(%arg0: i32, %arg1: i32, %arg2: i32) -> (i32, i32) {
    %c0_i32 = arith.constant 0 : i32
    return %arg2, %arg1 : i32, i32
  }
  func.func @transform_2(%arg0: i32, %arg1: i32, %arg2: i32) -> (i32, i32) {
    %c0_i32 = arith.constant 0 : i32
    %c0_i32_0 = arith.constant 0 : i32
    return %c0_i32, %arg1 : i32, i32
  }
  func.func @transform_3(%arg0: i32, %arg1: i32, %arg2: i32) -> (i32, i32) {
    %c0_i32 = arith.constant 0 : i32
    return %arg0, %arg1 : i32, i32
  }
}

</mosaic_0001>

<llo_original>
// kernel: tpu_custom_call.1
$region0: #{tpu_custom_call.1}
  #allocation0 [shape = 'u32[]', space=smem, size = 0x4, offset = 0x4, fixed_abs, tag = 'smem constant byte address 0x4 - core index']
  #allocation1 [shape = 'u32[144,128]{1,0:T(1,128)}', space=vmem, size = 0x12000, scoped, tag = 'internal scratch']
  #allocation2 [shape = 'f32[128,64]{1,0:T(8,128)}', space=vmem, size = 0x10000, scoped, tag = 'scratch operand']
  %s0 = inlined_call_operand.vmem [shape: bf16[128,147], index: 0, kind: input, shape index: {}]
  %s1 = inlined_call_operand.vmem [shape: bf16[147,64], index: 1, kind: input, shape index: {}]
  %s2 = inlined_call_operand.vmem [shape: f32[1,64], index: 2, kind: input, shape index: {}]
  %s3 = inlined_call_operand.vmem [shape: bf16[128,64], index: 3, kind: output, shape index: {}]
  %s4 = sld [smem:[#allocation0]]
  $region30: #{tpu_custom_call.1} parent=0
    _
  %s6 = ssub.s32 1, %s4
  %s7 = scalar_select 0, %s6, %s4
  // Predicated region
  $region2: #{tpu_custom_call.1} parent=0 // pred_check
    _
  $region3: #{tpu_custom_call.1} parent=0 // pred_check_branch
    %9 = sbr.rel (0) target = $region5
  $region4: #{tpu_custom_call.1} parent=0 // pred_region
    _
  $region5: #{tpu_custom_call.1} parent=0 // pred_fallthru
    _
  // Predicated region
  $region6: #{tpu_custom_call.1} parent=0 // pred_check
    _
  $region7: #{tpu_custom_call.1} parent=0 // pred_check_branch
    %11 = sbr.rel (0) target = $region9
  $region8: #{tpu_custom_call.1} parent=0 // pred_region
    _
  $region9: #{tpu_custom_call.1} parent=0 // pred_fallthru
    _
  // Predicated region
  $region10: #{tpu_custom_call.1} parent=0 // pred_check
    _
  $region11: #{tpu_custom_call.1} parent=0 // pred_check_branch
    %13 = sbr.rel (0) target = $region13
  $region12: #{tpu_custom_call.1} parent=0 // pred_region
    _
  $region13: #{tpu_custom_call.1} parent=0 // pred_fallthru
    _
  %p15 = scmp.eq.s32.totalorder 0, 0
  // Predicated region
  $region14: #{tpu_custom_call.1} parent=0 // pred_check
    %p16 = pneg %p15
  $region15: #{tpu_custom_call.1} parent=0 // pred_check_branch
    %18 = sbr.rel (%p16) target = $region17
  $region16: #{tpu_custom_call.1} parent=0 // pred_region
    %vm19 = vcmask 523264
    %20 = vst.msk [vmem:[#allocation2] sm:$0xff] %vm19, 0.0
    %21 = vst.msk [vmem:[#allocation2 + $0x8] sm:$0xff] %vm19, 0.0
    %22 = vst.msk [vmem:[#allocation2 + $0x10] sm:$0xff] %vm19, 0.0
    %23 = vst.msk [vmem:[#allocation2 + $0x18] sm:$0xff] %vm19, 0.0
    %24 = vst.msk [vmem:[#allocation2 + $0x20] sm:$0xff] %vm19, 0.0
    %25 = vst.msk [vmem:[#allocation2 + $0x28] sm:$0xff] %vm19, 0.0
    %26 = vst.msk [vmem:[#allocation2 + $0x30] sm:$0xff] %vm19, 0.0
    %27 = vst.msk [vmem:[#allocation2 + $0x38] sm:$0xff] %vm19, 0.0
    %28 = vst.msk [vmem:[#allocation2 + $0x40] sm:$0xff] %vm19, 0.0
    %29 = vst.msk [vmem:[#allocation2 + $0x48] sm:$0xff] %vm19, 0.0
    %30 = vst.msk [vmem:[#allocation2 + $0x50] sm:$0xff] %vm19, 0.0
    %31 = vst.msk [vmem:[#allocation2 + $0x58] sm:$0xff] %vm19, 0.0
    %32 = vst.msk [vmem:[#allocation2 + $0x60] sm:$0xff] %vm19, 0.0
    %33 = vst.msk [vmem:[#allocation2 + $0x68] sm:$0xff] %vm19, 0.0
    %34 = vst.msk [vmem:[#allocation2 + $0x70] sm:$0xff] %vm19, 0.0
    %35 = vst.msk [vmem:[#allocation2 + $0x78] sm:$0xff] %vm19, 0.0
  $region17: #{tpu_custom_call.1} parent=0 // pred_fallthru
    _
  %v36 = vld [vmem:[#allocation2] sm:$0xff]
  %v37 = vld [vmem:[#allocation2 + $0x8] sm:$0xff]
  %v38 = vld [vmem:[#allocation2 + $0x10] sm:$0xff]
  %v39 = vld [vmem:[#allocation2 + $0x18] sm:$0xff]
  %v40 = vld [vmem:[#allocation2 + $0x20] sm:$0xff]
  %v41 = vld [vmem:[#allocation2 + $0x28] sm:$0xff]
  %v42 = vld [vmem:[#allocation2 + $0x30] sm:$0xff]
  %v43 = vld [vmem:[#allocation2 + $0x38] sm:$0xff]
  %v44 = vld [vmem:[#allocation2 + $0x40] sm:$0xff]
  %v45 = vld [vmem:[#allocation2 + $0x48] sm:$0xff]
  %v46 = vld [vmem:[#allocation2 + $0x50] sm:$0xff]
  %v47 = vld [vmem:[#allocation2 + $0x58] sm:$0xff]
  %v48 = vld [vmem:[#allocation2 + $0x60] sm:$0xff]
  %v49 = vld [vmem:[#allocation2 + $0x68] sm:$0xff]
  %v50 = vld [vmem:[#allocation2 + $0x70] sm:$0xff]
  %v51 = vld [vmem:[#allocation2 + $0x78] sm:$0xff]
  %v52 = vld [vmem:[%s0] sm:$0xff]
  %v53 = vld [vmem:[%s0 + $0x8] sm:$0xff]
  %v54 = vld [vmem:[%s0 + $0x10] sm:$0xff]
  %v55 = vld [vmem:[%s0 + $0x18] sm:$0xff]
  %v56 = vld [vmem:[%s0 + $0x20] sm:$0xff]
  %v57 = vld [vmem:[%s0 + $0x28] sm:$0xff]
  %v58 = vld [vmem:[%s0 + $0x30] sm:$0xff]
  %v59 = vld [vmem:[%s0 + $0x38] sm:$0xff]
  %v60 = vld [vmem:[%s0 + $0x40] sm:$0xff]
  %v61 = vld [vmem:[%s0 + $0x48] sm:$0xff]
  %v62 = vld [vmem:[%s0 + $0x50] sm:$0xff]
  %v63 = vld [vmem:[%s0 + $0x58] sm:$0xff]
  %v64 = vld [vmem:[%s0 + $0x60] sm:$0xff]
  %v65 = vld [vmem:[%s0 + $0x68] sm:$0xff]
  %v66 = vld [vmem:[%s0 + $0x70] sm:$0xff]
  %v67 = vld [vmem:[%s0 + $0x78] sm:$0xff]
  %v68 = vld [vmem:[%s1] sm:$0xf]
  %v69 = vld [vmem:[%s1 + $0x4] sm:$0xf]
  %v70 = vld [vmem:[%s1 + $0x8] sm:$0xf]
  %v71 = vld [vmem:[%s1 + $0xc] sm:$0xf]
  %v72 = vld [vmem:[%s1 + $0x10] sm:$0xf]
  %v73 = vld [vmem:[%s1 + $0x14] sm:$0xf]
  %v74 = vld [vmem:[%s1 + $0x18] sm:$0xf]
  %v75 = vld [vmem:[%s1 + $0x1c] sm:$0xf]
  %v76 = vld [vmem:[%s1 + $0x20] sm:$0xf]
  %v77 = vld [vmem:[%s1 + $0x24] sm:$0xf]
  %v78 = vld [vmem:[%s1 + $0x28] sm:$0xf]
  %v79 = vld [vmem:[%s1 + $0x2c] sm:$0xf]
  %v80 = vld [vmem:[%s1 + $0x30] sm:$0xf]
  %v81 = vld [vmem:[%s1 + $0x34] sm:$0xf]
  %v82 = vld [vmem:[%s1 + $0x38] sm:$0xf]
  %v83 = vld [vmem:[%s1 + $0x3c] sm:$0xf]
  %v84 = vld [vmem:[%s1 + $0x40] sm:$0xf]
  %v85 = vld [vmem:[%s1 + $0x44] sm:$0xf]
  %v86 = vld [vmem:[%s1 + $0x48] sm:$0x3]
  %v103 = vunpack.c.l.b16 %v52
  %v104 = vunpack.c.h.b16 %v52
  %v105 = vunpack.c.l.b16 %v53
  %v106 = vunpack.c.h.b16 %v53
  %v107 = vunpack.c.l.b16 %v54
  %v108 = vunpack.c.h.b16 %v54
  %v109 = vunpack.c.l.b16 %v55
  %v110 = vunpack.c.h.b16 %v55
  %v111 = vunpack.c.l.b16 %v56
  %v112 = vunpack.c.h.b16 %v56
  %v113 = vunpack.c.l.b16 %v57
  %v114 = vunpack.c.h.b16 %v57
  %v115 = vunpack.c.l.b16 %v58
  %v116 = vunpack.c.h.b16 %v58
  %v117 = vunpack.c.l.b16 %v59
  %v118 = vunpack.c.h.b16 %v59
  %v119 = vunpack.c.l.b16 %v60
  %v120 = vunpack.c.h.b16 %v60
  %v121 = vunpack.c.l.b16 %v61
  %v122 = vunpack.c.h.b16 %v61
  %v123 = vunpack.c.l.b16 %v62
  %v124 = vunpack.c.h.b16 %v62
  %v125 = vunpack.c.l.b16 %v63
  %v126 = vunpack.c.h.b16 %v63
  %v127 = vunpack.c.l.b16 %v64
  %v128 = vunpack.c.h.b16 %v64
  %v129 = vunpack.c.l.b16 %v65
  %v130 = vunpack.c.h.b16 %v65
  %v131 = vunpack.c.l.b16 %v66
  %v132 = vunpack.c.h.b16 %v66
  %v133 = vunpack.c.l.b16 %v67
  %v134 = vunpack.c.h.b16 %v67
  %v135 = vpack.c.b16 %v105, %v103
  %v136 = vpack.c.b16 %v106, %v104
  %v137 = vpack.c.b16 %v109, %v107
  %v138 = vpack.c.b16 %v110, %v108
  %v139 = vpack.c.b16 %v113, %v111
  %v140 = vpack.c.b16 %v114, %v112
  %v141 = vpack.c.b16 %v117, %v115
  %v142 = vpack.c.b16 %v118, %v116
  %v143 = vpack.c.b16 %v121, %v119
  %v144 = vpack.c.b16 %v122, %v120
  %v145 = vpack.c.b16 %v125, %v123
  %v146 = vpack.c.b16 %v126, %v124
  %v147 = vpack.c.b16 %v129, %v127
  %v148 = vpack.c.b16 %v130, %v128
  %v149 = vpack.c.b16 %v133, %v131
  %v150 = vpack.c.b16 %v134, %v132
  %v178 = vunpack.c.l.b16 %v68
  %v179 = vunpack.c.l.b16 %v69
  %v180 = vunpack.c.l.b16 %v70
  %v181 = vunpack.c.l.b16 %v71
  %v182 = vunpack.c.l.b16 %v72
  %v183 = vunpack.c.l.b16 %v73
  %v184 = vunpack.c.l.b16 %v74
  %v185 = vunpack.c.l.b16 %v75
  %v186 = vunpack.c.l.b16 %v76
  %v187 = vunpack.c.l.b16 %v77
  %v188 = vunpack.c.l.b16 %v78
  %v189 = vunpack.c.l.b16 %v79
  %v190 = vunpack.c.l.b16 %v80
  %v191 = vunpack.c.l.b16 %v81
  %v192 = vunpack.c.l.b16 %v82
  %v193 = vunpack.c.l.b16 %v83
  %v194 = vunpack.c.l.b16 %v84
  %v195 = vunpack.c.l.b16 %v85
  %v196 = vunpack.c.l.b16 %v86
  %v197 = vpack.c.b16 %v179, %v178
  %v198 = vpack.c.b16 %v181, %v180
  %v199 = vpack.c.b16 %v183, %v182
  %v200 = vpack.c.b16 %v185, %v184
  %v201 = vpack.c.b16 %v187, %v186
  %v202 = vpack.c.b16 %v189, %v188
  %v203 = vpack.c.b16 %v191, %v190
  %v204 = vpack.c.b16 %v193, %v192
  %v205 = vpack.c.b16 %v195, %v194
  %v206 = vpack.c.b16 %v196, %v196
  %vm216 = vcmask 154624
  %v218 = vsel %vm216, %v136, 0
  %v221 = vsel %vm216, %v138, 0
  %v224 = vsel %vm216, %v140, 0
  %v227 = vsel %vm216, %v142, 0
  %v230 = vsel %vm216, %v144, 0
  %v233 = vsel %vm216, %v146, 0
  %v236 = vsel %vm216, %v148, 0
  %v239 = vsel %vm216, %v150, 0
  %vm241 = vcmask 1040384
  %vm242 = vcmask 1041408
  %v243 = vsel %vm241, 4294967295, 65535
  %v244 = vsel %vm242, %v243, 0
  %v246 = vand.u32 %v206, %v244
  %248 = vmatprep.subr.bf16.mxu0 0
  %249 = vmatpush1.bf16.msra.mxu0 %v197
  %250 = vmatprep.subr.bf16.mxu0 0
  %251 = vmatpush1.bf16.msra.mxu0 %v198
  %252 = vmatprep.subr.bf16.mxu0 0
  %253 = vmatpush1.bf16.msra.mxu0 %v199
  %254 = vmatprep.subr.bf16.mxu0 0
  %255 = vmatpush1.bf16.msra.mxu0 %v200
  %256 = vmatprep.subr.bf16.mxu0 0
  %257 = vmatpush1.bf16.msra.mxu0 %v201
  %258 = vmatprep.subr.bf16.mxu0 0
  %259 = vmatpush1.bf16.msra.mxu0 %v202
  %260 = vmatprep.subr.bf16.mxu0 0
  %261 = vmatpush1.bf16.msra.mxu0 %v203
  %262 = vmatprep.subr.bf16.mxu0 0
  %263 = vmatpush1.bf16.msra.mxu0 %v204
  %264 = vmatprep.subr.bf16.mxu0 0
  %265 = vmatpush1.bf16.msra.mxu0 %v205
  %266 = vmatprep.subr.bf16.mxu0 0
  %267 = vmatpush1.bf16.msra.mxu0 %v246
  %268 = vmatprep.subr.bf16.mxu0 0
  %269 = vmatpush1.bf16.msra.mxu0 0
  %270 = vmatprep.subr.bf16.mxu0 0
  %271 = vmatpush1.bf16.msra.mxu0 0
  %272 = vmatprep.subr.bf16.mxu0 0
  %273 = vmatpush1.bf16.msra.mxu0 0
  %274 = vmatprep.subr.bf16.mxu0 0
  %275 = vmatpush1.bf16.msra.mxu0 0
  %276 = vmatprep.subr.bf16.mxu0 0
  %277 = vmatpush1.bf16.msra.mxu0 0
  %278 = vmatprep.subr.bf16.mxu0 0
  %279 = vmatpush1.bf16.msra.mxu0 0
  %280 = vmatprep.mubr.bf16.mxu0 %v218
  %281 = vmatmul.mubr.bf16.gmra.mrb[0].mxu0 %v135
  %v282 = vpop.f32.mrb[0].mxu0
  %v283 = vadd.f32 0.0, %v282
  %v284 = vpop.f32.mrb[0].mxu0
  %v285 = vpop.f32.mrb[0].mxu0
  %v286 = vadd.f32 0.0, %v285
  %v287 = vpop.f32.mrb[0].mxu0
  %288 = vmatprep.mubr.bf16.mxu0 %v221
  %289 = vmatmul.mubr.bf16.gmra.mrb[0].mxu0 %v137
  %v290 = vpop.f32.mrb[0].mxu0
  %v291 = vadd.f32 0.0, %v290
  %v292 = vpop.f32.mrb[0].mxu0
  %v293 = vpop.f32.mrb[0].mxu0
  %v294 = vadd.f32 0.0, %v293
  %v295 = vpop.f32.mrb[0].mxu0
  %296 = vmatprep.mubr.bf16.mxu0 %v224
  %297 = vmatmul.mubr.bf16.gmra.mrb[0].mxu0 %v139
  %v298 = vpop.f32.mrb[0].mxu0
  %v299 = vadd.f32 0.0, %v298
  %v300 = vpop.f32.mrb[0].mxu0
  %v301 = vpop.f32.mrb[0].mxu0
  %v302 = vadd.f32 0.0, %v301
  %v303 = vpop.f32.mrb[0].mxu0
  %304 = vmatprep.mubr.bf16.mxu0 %v227
  %305 = vmatmul.mubr.bf16.gmra.mrb[0].mxu0 %v141
  %v306 = vpop.f32.mrb[0].mxu0
  %v307 = vadd.f32 0.0, %v306
  %v308 = vpop.f32.mrb[0].mxu0
  %v309 = vpop.f32.mrb[0].mxu0
  %v310 = vadd.f32 0.0, %v309
  %v311 = vpop.f32.mrb[0].mxu0
  %312 = vmatprep.mubr.bf16.mxu0 %v230
  %313 = vmatmul.mubr.bf16.gmra.mrb[0].mxu0 %v143
  %v314 = vpop.f32.mrb[0].mxu0
  %v315 = vadd.f32 0.0, %v314
  %v316 = vpop.f32.mrb[0].mxu0
  %v317 = vpop.f32.mrb[0].mxu0
  %v318 = vadd.f32 0.0, %v317
  %v319 = vpop.f32.mrb[0].mxu0
  %320 = vmatprep.mubr.bf16.mxu0 %v233
  %321 = vmatmul.mubr.bf16.gmra.mrb[0].mxu0 %v145
  %v322 = vpop.f32.mrb[0].mxu0
  %v323 = vadd.f32 0.0, %v322
  %v324 = vpop.f32.mrb[0].mxu0
  %v325 = vpop.f32.mrb[0].mxu0
  %v326 = vadd.f32 0.0, %v325
  %v327 = vpop.f32.mrb[0].mxu0
  %328 = vmatprep.mubr.bf16.mxu0 %v236
  %329 = vmatmul.mubr.bf16.gmra.mrb[0].mxu0 %v147
  %v330 = vpop.f32.mrb[0].mxu0
  %v331 = vadd.f32 0.0, %v330
  %v332 = vpop.f32.mrb[0].mxu0
  %v333 = vpop.f32.mrb[0].mxu0
  %v334 = vadd.f32 0.0, %v333
  %v335 = vpop.f32.mrb[0].mxu0
  %336 = vmatprep.mubr.bf16.mxu0 %v239
  %337 = vmatmul.mubr.bf16.gmra.mrb[0].mxu0 %v149
  %v338 = vpop.f32.mrb[0].mxu0
  %v339 = vadd.f32 0.0, %v338
  %v340 = vpop.f32.mrb[0].mxu0
  %v341 = vpop.f32.mrb[0].mxu0
  %v342 = vadd.f32 0.0, %v341
  %v343 = vpop.f32.mrb[0].mxu0
  %344 = vdwg.mxu0
  %v345 = vadd.f32 %v36, %v283
  %v346 = vadd.f32 %v37, %v286
  %v347 = vadd.f32 %v38, %v291
  %v348 = vadd.f32 %v39, %v294
  %v349 = vadd.f32 %v40, %v299
  %v350 = vadd.f32 %v41, %v302
  %v351 = vadd.f32 %v42, %v307
  %v352 = vadd.f32 %v43, %v310
  %v353 = vadd.f32 %v44, %v315
  %v354 = vadd.f32 %v45, %v318
  %v355 = vadd.f32 %v46, %v323
  %v356 = vadd.f32 %v47, %v326
  %v357 = vadd.f32 %v48, %v331
  %v358 = vadd.f32 %v49, %v334
  %v359 = vadd.f32 %v50, %v339
  %v360 = vadd.f32 %v51, %v342
  %vm361 = vcmask 523264
  %362 = vst.msk [vmem:[#allocation2] sm:$0xff] %vm361, %v345
  %363 = vst.msk [vmem:[#allocation2 + $0x8] sm:$0xff] %vm361, %v346
  %364 = vst.msk [vmem:[#allocation2 + $0x10] sm:$0xff] %vm361, %v347
  %365 = vst.msk [vmem:[#allocation2 + $0x18] sm:$0xff] %vm361, %v348
  %366 = vst.msk [vmem:[#allocation2 + $0x20] sm:$0xff] %vm361, %v349
  %367 = vst.msk [vmem:[#allocation2 + $0x28] sm:$0xff] %vm361, %v350
  %368 = vst.msk [vmem:[#allocation2 + $0x30] sm:$0xff] %vm361, %v351
  %369 = vst.msk [vmem:[#allocation2 + $0x38] sm:$0xff] %vm361, %v352
  %370 = vst.msk [vmem:[#allocation2 + $0x40] sm:$0xff] %vm361, %v353
  %371 = vst.msk [vmem:[#allocation2 + $0x48] sm:$0xff] %vm361, %v354
  %372 = vst.msk [vmem:[#allocation2 + $0x50] sm:$0xff] %vm361, %v355
  %373 = vst.msk [vmem:[#allocation2 + $0x58] sm:$0xff] %vm361, %v356
  %374 = vst.msk [vmem:[#allocation2 + $0x60] sm:$0xff] %vm361, %v357
  %375 = vst.msk [vmem:[#allocation2 + $0x68] sm:$0xff] %vm361, %v358
  %376 = vst.msk [vmem:[#allocation2 + $0x70] sm:$0xff] %vm361, %v359
  %377 = vst.msk [vmem:[#allocation2 + $0x78] sm:$0xff] %vm361, %v360
  // Predicated region
  $region18: #{tpu_custom_call.1} parent=0 // pred_check
    %p378 = pneg %p15
  $region19: #{tpu_custom_call.1} parent=0 // pred_check_branch
    %380 = sbr.rel (%p378) target = $region21
  $region20: #{tpu_custom_call.1} parent=0 // pred_region
    %v381 = vld [vmem:[#allocation2] sm:$0xff]
    %v382 = vld [vmem:[#allocation2 + $0x8] sm:$0xff]
    %v383 = vld [vmem:[#allocation2 + $0x10] sm:$0xff]
    %v384 = vld [vmem:[#allocation2 + $0x18] sm:$0xff]
    %v385 = vld [vmem:[#allocation2 + $0x20] sm:$0xff]
    %v386 = vld [vmem:[#allocation2 + $0x28] sm:$0xff]
    %v387 = vld [vmem:[#allocation2 + $0x30] sm:$0xff]
    %v388 = vld [vmem:[#allocation2 + $0x38] sm:$0xff]
    %v389 = vld [vmem:[#allocation2 + $0x40] sm:$0xff]
    %v390 = vld [vmem:[#allocation2 + $0x48] sm:$0xff]
    %v391 = vld [vmem:[#allocation2 + $0x50] sm:$0xff]
    %v392 = vld [vmem:[#allocation2 + $0x58] sm:$0xff]
    %v393 = vld [vmem:[#allocation2 + $0x60] sm:$0xff]
    %v394 = vld [vmem:[#allocation2 + $0x68] sm:$0xff]
    %v395 = vld [vmem:[#allocation2 + $0x70] sm:$0xff]
    %v396 = vld [vmem:[#allocation2 + $0x78] sm:$0xff]
    %v397 = vld [vmem:[%s2] sm:$0x1]
    %v399 = vlaneseq
    %v400 = vshrl.u32 %v399, 7
    %v401 = vsub.s32 0, %v400
    %v402 = vrot.slane %v397, %v401
    %v404 = vadd.f32 %v381, %v402
    %v405 = vadd.f32 %v382, %v402
    %v406 = vadd.f32 %v383, %v402
    %v407 = vadd.f32 %v384, %v402
    %v408 = vadd.f32 %v385, %v402
    %v409 = vadd.f32 %v386, %v402
    %v410 = vadd.f32 %v387, %v402
    %v411 = vadd.f32 %v388, %v402
    %v412 = vadd.f32 %v389, %v402
    %v413 = vadd.f32 %v390, %v402
    %v414 = vadd.f32 %v391, %v402
    %v415 = vadd.f32 %v392, %v402
    %v416 = vadd.f32 %v393, %v402
    %v417 = vadd.f32 %v394, %v402
    %v418 = vadd.f32 %v395, %v402
    %v419 = vadd.f32 %v396, %v402
    %v420 = vmax.f32 %v404, 0.0
    %v421 = vmax.f32 %v405, 0.0
    %v422 = vmax.f32 %v406, 0.0
    %v423 = vmax.f32 %v407, 0.0
    %v424 = vmax.f32 %v408, 0.0
    %v425 = vmax.f32 %v409, 0.0
    %v426 = vmax.f32 %v410, 0.0
    %v427 = vmax.f32 %v411, 0.0
    %v428 = vmax.f32 %v412, 0.0
    %v429 = vmax.f32 %v413, 0.0
    %v430 = vmax.f32 %v414, 0.0
    %v431 = vmax.f32 %v415, 0.0
    %v432 = vmax.f32 %v416, 0.0
    %v433 = vmax.f32 %v417, 0.0
    %v434 = vmax.f32 %v418, 0.0
    %v435 = vmax.f32 %v419, 0.0
    %v436 = vpack.c.bf16 %v421, %v420
    %v437 = vpack.c.bf16 %v423, %v422
    %v438 = vpack.c.bf16 %v425, %v424
    %v439 = vpack.c.bf16 %v427, %v426
    %v440 = vpack.c.bf16 %v429, %v428
    %v441 = vpack.c.bf16 %v431, %v430
    %v442 = vpack.c.bf16 %v433, %v432
    %v443 = vpack.c.bf16 %v435, %v434
    %v452 = vunpack.c.l.b16 %v436
    %v453 = vunpack.c.h.b16 %v436
    %v454 = vunpack.c.l.b16 %v437
    %v455 = vunpack.c.h.b16 %v437
    %v456 = vunpack.c.l.b16 %v438
    %v457 = vunpack.c.h.b16 %v438
    %v458 = vunpack.c.l.b16 %v439
    %v459 = vunpack.c.h.b16 %v439
    %v460 = vunpack.c.l.b16 %v440
    %v461 = vunpack.c.h.b16 %v440
    %v462 = vunpack.c.l.b16 %v441
    %v463 = vunpack.c.h.b16 %v441
    %v464 = vunpack.c.l.b16 %v442
    %v465 = vunpack.c.h.b16 %v442
    %v466 = vunpack.c.l.b16 %v443
    %v467 = vunpack.c.h.b16 %v443
    %v468 = vpack.c.b16 %v452, %v452
    %v469 = vpack.c.b16 %v453, %v453
    %v470 = vpack.c.b16 %v454, %v454
    %v471 = vpack.c.b16 %v455, %v455
    %v472 = vpack.c.b16 %v456, %v456
    %v473 = vpack.c.b16 %v457, %v457
    %v474 = vpack.c.b16 %v458, %v458
    %v475 = vpack.c.b16 %v459, %v459
    %v476 = vpack.c.b16 %v460, %v460
    %v477 = vpack.c.b16 %v461, %v461
    %v478 = vpack.c.b16 %v462, %v462
    %v479 = vpack.c.b16 %v463, %v463
    %v480 = vpack.c.b16 %v464, %v464
    %v481 = vpack.c.b16 %v465, %v465
    %v482 = vpack.c.b16 %v466, %v466
    %v483 = vpack.c.b16 %v467, %v467
    %vm500 = vcmask 519168
    %501 = vst.msk [vmem:[%s3] sm:$0xf] %vm500, %v468
    %502 = vst.msk [vmem:[%s3 + $0x4] sm:$0xf] %vm500, %v469
    %503 = vst.msk [vmem:[%s3 + $0x8] sm:$0xf] %vm500, %v470
    %504 = vst.msk [vmem:[%s3 + $0xc] sm:$0xf] %vm500, %v471
    %505 = vst.msk [vmem:[%s3 + $0x10] sm:$0xf] %vm500, %v472
    %506 = vst.msk [vmem:[%s3 + $0x14] sm:$0xf] %vm500, %v473
    %507 = vst.msk [vmem:[%s3 + $0x18] sm:$0xf] %vm500, %v474
    %508 = vst.msk [vmem:[%s3 + $0x1c] sm:$0xf] %vm500, %v475
    %509 = vst.msk [vmem:[%s3 + $0x20] sm:$0xf] %vm500, %v476
    %510 = vst.msk [vmem:[%s3 + $0x24] sm:$0xf] %vm500, %v477
    %511 = vst.msk [vmem:[%s3 + $0x28] sm:$0xf] %vm500, %v478
    %512 = vst.msk [vmem:[%s3 + $0x2c] sm:$0xf] %vm500, %v479
    %513 = vst.msk [vmem:[%s3 + $0x30] sm:$0xf] %vm500, %v480
    %514 = vst.msk [vmem:[%s3 + $0x34] sm:$0xf] %vm500, %v481
    %515 = vst.msk [vmem:[%s3 + $0x38] sm:$0xf] %vm500, %v482
    %516 = vst.msk [vmem:[%s3 + $0x3c] sm:$0xf] %vm500, %v483
  $region21: #{tpu_custom_call.1} parent=0 // pred_fallthru
    _
  // Predicated region
  $region22: #{tpu_custom_call.1} parent=0 // pred_check
    _
  $region23: #{tpu_custom_call.1} parent=0 // pred_check_branch
    %518 = sbr.rel (0) target = $region25
  $region24: #{tpu_custom_call.1} parent=0 // pred_region
    _
  $region25: #{tpu_custom_call.1} parent=0 // pred_fallthru
    _
  // Predicated region
  $region26: #{tpu_custom_call.1} parent=0 // pred_check
    _
  $region27: #{tpu_custom_call.1} parent=0 // pred_check_branch
    %520 = sbr.rel (0) target = $region29
  $region28: #{tpu_custom_call.1} parent=0 // pred_region
    _
  $region29: #{tpu_custom_call.1} parent=0 // pred_fallthru
    _

</llo_original>
